<compile_context>
chip_gen: v7x
topology: tpu7x:2x2x1
jax: 0.10.0
libtpu: 0.0.40
codegen_flags: <defaults>
</compile_context>

<pallas_src>
import functools

import jax
import jax.numpy as jnp
from jax.experimental import pallas as pl
from jax.experimental.pallas import tpu as pltpu


def _round_up(n, m):
    return ((n + m - 1) // m) * m


def _pick_batch_tile(batch, tm_max=512):
    """Big tiles to amortize per-grid-step overhead, but keep >=2 grid steps
    (when the batch allows) so both v7x TensorCores get work."""
    b8 = _round_up(batch, 8)
    if b8 <= 8:
        return 8
    two_way = _round_up(pl.cdiv(b8, 2), 8)
    return max(8, min(tm_max, two_way))


def _vmem_limit_bytes(footprint_bytes):
    """Footprint-derived scoped-VMEM request; never ask for all of v7x's 64 MiB."""
    want = max(16 * 1024 * 1024, 2 * int(footprint_bytes) + 2 * 1024 * 1024)
    try:
        cap = int(0.75 * pltpu.get_tpu_info().vmem_capacity_bytes)
    except Exception:
        cap = 48 * 1024 * 1024          # conservative (v7x-safe) fallback
    return int(min(want, cap))


# ----------------------------- Pallas kernel ------------------------------- #

def _make_mlp_kernel(n_layers, out_widths):
    """Fused kernel over one (tm, Din) batch tile; all layers stay on-chip."""

    def kernel(x_ref, *refs):
        o_ref = refs[-1]
        shifts_ref = refs[-2]            # (n_layers, Wmax) coalesced shift/bias, f32
        w_refs = refs[:-2]               # resident weights (BN scale pre-folded)
        h = x_ref[...]                   # f32 activations
        for i in range(n_layers):
            w = w_refs[i][...]
            shift = shifts_ref[i:i + 1, :out_widths[i]]
            y = jnp.dot(h.astype(w.dtype), w,
                        preferred_element_type=jnp.float32) + shift
            if i < n_layers - 1:
                h = jnp.maximum(y, 0.01 * y)     # LeakyReLU(0.01)
                # Dropout: identity in eval mode.
            else:
                o_ref[...] = y
    return kernel


# ----------------------------- param packing ------------------------------- #

def pack_params(params, eps=1e-5, weight_dtype=jnp.bfloat16):
    """One-time fold + pad (outside the hot path).

    Hidden layer:  w_folded = w * scale,  shift = (b - mean) * scale + beta,
    scale = gamma * rsqrt(var + eps).  Layer OUTPUT widths are padded to a
    multiple of 128; the first layer's input dim stays un-padded.  Returns
    (w_0, ..., w_last, shifts) with shifts one coalesced f32 array.
    """
    ws, shift_rows, widths = [], [], []
    prev_p = None
    for layer in params["hidden"]:
        scale = layer["gamma"] * jax.lax.rsqrt(layer["running_var"] + eps)
        shift = (layer["b"] - layer["running_mean"]) * scale + layer["beta"]
        w = layer["w"] * scale[None, :]
        din, dout = w.shape
        din_p = din if prev_p is None else prev_p
        dout_p = _round_up(dout, 128)
        w_p = jnp.zeros((din_p, dout_p), jnp.float32).at[:din, :dout].set(w)
        ws.append(w_p.astype(weight_dtype))
        shift_rows.append(jnp.zeros((dout_p,), jnp.float32).at[:dout].set(shift))
        widths.append(dout_p)
        prev_p = dout_p
    fin = params["final"]
    din, dout = fin["w"].shape
    din_p = din if prev_p is None else prev_p
    dout_p = _round_up(dout, 128)
    w_p = jnp.zeros((din_p, dout_p), jnp.float32).at[:din, :dout].set(fin["w"])
    ws.append(w_p.astype(weight_dtype))
    shift_rows.append(jnp.zeros((dout_p,), jnp.float32).at[:dout].set(fin["b"]))
    widths.append(dout_p)

    wmax = max(widths)
    shifts = jnp.stack([jnp.zeros((wmax,), jnp.float32).at[:r.shape[0]].set(r)
                        for r in shift_rows])
    return tuple(ws) + (shifts,)


# ------------------------------ forward pass -------------------------------- #

@functools.partial(jax.jit,
                   static_argnames=("output_dim", "tm", "single_buffer_weights"))
def _mlp_forward_impl(packed, x, *, output_dim, tm, single_buffer_weights):
    ws, shifts = packed[:-1], packed[-1]
    n_layers = len(ws)
    B, din = x.shape
    out_widths = tuple(int(w.shape[1]) for w in ws)
    dout_p = out_widths[-1]

    if tm is None:
        tm = _pick_batch_tile(B)
    else:
        tm = max(8, min(_round_up(tm, 8), _round_up(B, 8)))
    b_p = _round_up(B, tm)
    x_p = x if b_p == B else jnp.zeros((b_p, din), x.dtype).at[:B].set(x)

    single_buffer = bool(single_buffer_weights) and hasattr(pl, "Buffered")

    def resident_spec(shape):
        if single_buffer:
            return pl.BlockSpec(shape, lambda i: (0, 0),
                                pipeline_mode=pl.Buffered(1))
        return pl.BlockSpec(shape, lambda i: (0, 0))

    in_specs = [pl.BlockSpec((tm, din), lambda i: (i, 0))]   # un-padded features
    in_specs += [resident_spec(w.shape) for w in ws]         # resident weights
    in_specs += [resident_spec(shifts.shape)]                # coalesced shifts
    out_spec = pl.BlockSpec((tm, dout_p), lambda i: (i, 0))  # lane-dense output

    # Advisory cost estimate + footprint-derived VMEM request.
    nbytes = lambda a: int(a.size) * a.dtype.itemsize
    flops = 2 * b_p * sum(int(w.shape[0]) * int(w.shape[1]) for w in ws)
    param_bytes = sum(nbytes(w) for w in ws) + nbytes(shifts)
    io_bytes = b_p * din * 4 + b_p * dout_p * 4
    wmax = max(out_widths)
    footprint = ((1 if single_buffer else 2) * param_bytes   # resident params
                 + 2 * tm * din * 4 + 2 * tm * dout_p * 4    # pipelined x / out tiles
                 + 4 * tm * wmax * 4)                        # live f32 intermediates

    out = pl.pallas_call(
        _make_mlp_kernel(n_layers, out_widths),
        out_shape=jax.ShapeDtypeStruct((b_p, dout_p), jnp.float32),
        grid=(b_p // tm,),
        in_specs=in_specs,
        out_specs=out_spec,
        compiler_params=pltpu.CompilerParams(
            dimension_semantics=("parallel",),
            vmem_limit_bytes=_vmem_limit_bytes(footprint),
        ),
        cost_estimate=pl.CostEstimate(
            flops=flops, transcendentals=0,
            bytes_accessed=param_bytes + io_bytes),
    )(x_p, *ws, shifts)

    return out[:B, :output_dim]


def mlp_forward(packed, x, *, output_dim, tm=None):
    """Eval-mode MLP forward: one fused Pallas kernel over batch tiles."""
    try:
        return jax.block_until_ready(
            _mlp_forward_impl(packed, x, output_dim=output_dim, tm=tm,
                              single_buffer_weights=True))
    except Exception:
        # Fallback for jax versions without BlockSpec pipeline_mode support.
        return jax.block_until_ready(
            _mlp_forward_impl(packed, x, output_dim=output_dim, tm=tm,
                              single_buffer_weights=False))


# --------------------------- params / reference ----------------------------- #

def init_mlp_params(key, input_dim, hidden_dims, output_dim):
    """Deterministic synthetic parameters (shapes match the PyTorch module)."""
    params = {"hidden": [], "final": None}
    in_dim = input_dim
    for h in hidden_dims:
        key, kw, kb, kg, kbe, km, kv = jax.random.split(key, 7)
        params["hidden"].append({
            # Linear: stored pre-transposed as (in, out) for x @ W
            "w": 0.1 * jax.random.normal(kw, (in_dim, h), jnp.float32),
            "b": 0.1 * jax.random.normal(kb, (h,), jnp.float32),
            # BatchNorm1d (eval-mode running stats + affine)
            "gamma": 1.0 + 0.1 * jax.random.normal(kg, (h,), jnp.float32),
            "beta": 0.1 * jax.random.normal(kbe, (h,), jnp.float32),
            "running_mean": 0.1 * jax.random.normal(km, (h,), jnp.float32),
            "running_var": 1.0 + 0.1 * jax.random.uniform(kv, (h,), jnp.float32),
        })
        in_dim = h
    key, kw, kb = jax.random.split(key, 3)
    params["final"] = {
        "w": 0.1 * jax.random.normal(kw, (in_dim, output_dim), jnp.float32),
        "b": 0.1 * jax.random.normal(kb, (output_dim,), jnp.float32),
    }
    return params


def mlp_forward_ref(params, x, eps=1e-5):
    """Pure-JAX reference (PyTorch eval-mode semantics)."""
    h = x
    for layer in params["hidden"]:
        y = h @ layer["w"] + layer["b"]
        y = (y - layer["running_mean"]) * jax.lax.rsqrt(
            layer["running_var"] + eps) * layer["gamma"] + layer["beta"]
        h = jnp.where(y > 0.0, y, 0.01 * y)
    fin = params["final"]
    return h @ fin["w"] + fin["b"]


# ---------------------------------- main ------------------------------------ #

if __name__ == "__main__":
    input_dim, hidden_dims, output_dim = 16, (32, 64), 8
    batch = 8

    key = jax.random.PRNGKey(0)
    key, kx = jax.random.split(key)
    params = init_mlp_params(key, input_dim, hidden_dims, output_dim)
    x = jax.random.normal(kx, (batch, input_dim), jnp.float32)
    ref = jax.block_until_ready(mlp_forward_ref(params, x))

    # bf16 MXU path (f32 accumulation + f32 epilogue) -- production default.
    packed_bf16 = jax.block_until_ready(pack_params(params, weight_dtype=jnp.bfloat16))
    out = mlp_forward(packed_bf16, x, output_dim=output_dim)
    assert out.shape == (batch, output_dim), out.shape
    assert jnp.allclose(out, ref, atol=2e-2, rtol=2e-2), \
        float(jnp.max(jnp.abs(out - ref)))

    # f32 path for tight-numerics validation against the PyTorch-style reference.
    packed_f32 = jax.block_until_ready(pack_params(params, weight_dtype=jnp.float32))
    out32 = mlp_forward(packed_f32, x, output_dim=output_dim)
    assert out32.shape == (batch, output_dim), out32.shape
    assert jnp.allclose(out32, ref, atol=1e-4, rtol=1e-4), \
        float(jnp.max(jnp.abs(out32 - ref)))

    print("KERNEL_OK")
</pallas_src>

<mosaic_0001>
module attributes {stable_mosaic.version = 11 : i64} {
  func.func @kernel(%arg0: i32, %arg1: memref<8x16xf32, #tpu.memory_space<vmem>>, %arg2: memref<16x128xbf16, #tpu.memory_space<vmem>>, %arg3: memref<128x128xbf16, #tpu.memory_space<vmem>>, %arg4: memref<128x128xbf16, #tpu.memory_space<vmem>>, %arg5: memref<3x128xf32, #tpu.memory_space<vmem>>, %arg6: memref<8x128xf32, #tpu.memory_space<vmem>>) attributes {dimension_semantics = [#tpu.dimension_semantics<parallel>], iteration_bounds = array<i64: 1>, scalar_prefetch = 0 : i64, scratch_operands = 0 : i64, tpu.core_type = #tpu.core_type<tc>, window_params = [{transform_indices = @transform_0, window_bounds = array<i64: 8, 16>}, {pipeline_mode = #tpu.pipeline_mode<synchronous>, transform_indices = @transform_1, window_bounds = array<i64: 16, 128>}, {pipeline_mode = #tpu.pipeline_mode<synchronous>, transform_indices = @transform_2, window_bounds = array<i64: 128, 128>}, {pipeline_mode = #tpu.pipeline_mode<synchronous>, transform_indices = @transform_3, window_bounds = array<i64: 128, 128>}, {pipeline_mode = #tpu.pipeline_mode<synchronous>, transform_indices = @transform_4, window_bounds = array<i64: 3, 128>}, {transform_indices = @transform_5, window_bounds = array<i64: 8, 128>}]} {
    %c0 = arith.constant 0 : index
    %c0_0 = arith.constant 0 : index
    %0 = vector.load %arg1[%c0, %c0_0] : memref<8x16xf32, #tpu.memory_space<vmem>>, vector<8x16xf32>
    %c0_1 = arith.constant 0 : index
    %c0_2 = arith.constant 0 : index
    %1 = vector.load %arg2[%c0_1, %c0_2] : memref<16x128xbf16, #tpu.memory_space<vmem>>, vector<16x128xbf16>
    %c0_3 = arith.constant 0 : index
    %c0_4 = arith.constant 0 : index
    %2 = vector.load %arg5[%c0_3, %c0_4] : memref<3x128xf32, #tpu.memory_space<vmem>>, vector<1x128xf32>
    %3 = arith.truncf %0 : vector<8x16xf32> to vector<8x16xbf16>
    %cst = arith.constant dense<0.000000e+00> : vector<8x128xf32>
    %4 = tpu.matmul %3, %1, %cst {dimension_numbers = #tpu.dot_dimension_numbers<[1], [0], [0], [1], [0, 0, 1, 1], [], []>} : vector<8x16xbf16>, vector<16x128xbf16>, vector<8x128xf32> -> vector<8x128xf32>
    %5 = vector.broadcast %2 : vector<1x128xf32> to vector<8x128xf32>
    %6 = arith.addf %4, %5 : vector<8x128xf32>
    %cst_5 = arith.constant 0.00999999977 : f32
    %7 = vector.broadcast %cst_5 : f32 to vector<8x128xf32>
    %8 = arith.mulf %7, %6 : vector<8x128xf32>
    %9 = arith.maximumf %6, %8 : vector<8x128xf32>
    %c0_6 = arith.constant 0 : index
    %c0_7 = arith.constant 0 : index
    %10 = vector.load %arg3[%c0_6, %c0_7] : memref<128x128xbf16, #tpu.memory_space<vmem>>, vector<128x128xbf16>
    %c1 = arith.constant 1 : index
    %c0_8 = arith.constant 0 : index
    %11 = vector.load %arg5[%c1, %c0_8] : memref<3x128xf32, #tpu.memory_space<vmem>>, vector<1x128xf32>
    %12 = arith.truncf %9 : vector<8x128xf32> to vector<8x128xbf16>
    %cst_9 = arith.constant dense<0.000000e+00> : vector<8x128xf32>
    %13 = tpu.matmul %12, %10, %cst_9 {dimension_numbers = #tpu.dot_dimension_numbers<[1], [0], [0], [1], [0, 0, 1, 1], [], []>} : vector<8x128xbf16>, vector<128x128xbf16>, vector<8x128xf32> -> vector<8x128xf32>
    %14 = vector.broadcast %11 : vector<1x128xf32> to vector<8x128xf32>
    %15 = arith.addf %13, %14 : vector<8x128xf32>
    %cst_10 = arith.constant 0.00999999977 : f32
    %16 = vector.broadcast %cst_10 : f32 to vector<8x128xf32>
    %17 = arith.mulf %16, %15 : vector<8x128xf32>
    %18 = arith.maximumf %15, %17 : vector<8x128xf32>
    %c0_11 = arith.constant 0 : index
    %c0_12 = arith.constant 0 : index
    %19 = vector.load %arg4[%c0_11, %c0_12] : memref<128x128xbf16, #tpu.memory_space<vmem>>, vector<128x128xbf16>
    %c2 = arith.constant 2 : index
    %c0_13 = arith.constant 0 : index
    %20 = vector.load %arg5[%c2, %c0_13] : memref<3x128xf32, #tpu.memory_space<vmem>>, vector<1x128xf32>
    %21 = arith.truncf %18 : vector<8x128xf32> to vector<8x128xbf16>
    %cst_14 = arith.constant dense<0.000000e+00> : vector<8x128xf32>
    %22 = tpu.matmul %21, %19, %cst_14 {dimension_numbers = #tpu.dot_dimension_numbers<[1], [0], [0], [1], [0, 0, 1, 1], [], []>} : vector<8x128xbf16>, vector<128x128xbf16>, vector<8x128xf32> -> vector<8x128xf32>
    %23 = vector.broadcast %20 : vector<1x128xf32> to vector<8x128xf32>
    %24 = arith.addf %22, %23 : vector<8x128xf32>
    %c0_15 = arith.constant 0 : index
    %c0_16 = arith.constant 0 : index
    %25 = vector.load %arg6[%c0_15, %c0_16] : memref<8x128xf32, #tpu.memory_space<vmem>>, vector<8x128xf32>
    tpu.vector_store %arg6[%c0_15, %c0_16], %24 {strides = array<i32>} : memref<8x128xf32, #tpu.memory_space<vmem>>, vector<8x128xf32>,
    return
  }
  func.func @transform_0(%arg0: i32) -> (i32, i32) {
    %c0_i32 = arith.constant 0 : i32
    %c0_i32_0 = arith.constant 0 : i32
    return %arg0, %c0_i32 : i32, i32
  }
  func.func @transform_1(%arg0: i32) -> (i32, i32) {
    %c0_i32 = arith.constant 0 : i32
    %c0_i32_0 = arith.constant 0 : i32
    %c0_i32_1 = arith.constant 0 : i32
    return %c0_i32, %c0_i32_0 : i32, i32
  }
  func.func @transform_2(%arg0: i32) -> (i32, i32) {
    %c0_i32 = arith.constant 0 : i32
    %c0_i32_0 = arith.constant 0 : i32
    %c0_i32_1 = arith.constant 0 : i32
    return %c0_i32, %c0_i32_0 : i32, i32
  }
  func.func @transform_3(%arg0: i32) -> (i32, i32) {
    %c0_i32 = arith.constant 0 : i32
    %c0_i32_0 = arith.constant 0 : i32
    %c0_i32_1 = arith.constant 0 : i32
    return %c0_i32, %c0_i32_0 : i32, i32
  }
  func.func @transform_4(%arg0: i32) -> (i32, i32) {
    %c0_i32 = arith.constant 0 : i32
    %c0_i32_0 = arith.constant 0 : i32
    %c0_i32_1 = arith.constant 0 : i32
    return %c0_i32, %c0_i32_0 : i32, i32
  }
  func.func @transform_5(%arg0: i32) -> (i32, i32) {
    %c0_i32 = arith.constant 0 : i32
    %c0_i32_0 = arith.constant 0 : i32
    return %arg0, %c0_i32 : i32, i32
  }
}

module attributes {stable_mosaic.version = 11 : i64} {
  func.func @kernel(%arg0: i32, %arg1: memref<8x16xf32, #tpu.memory_space<vmem>>, %arg2: memref<16x128xbf16, #tpu.memory_space<vmem>>, %arg3: memref<128x128xbf16, #tpu.memory_space<vmem>>, %arg4: memref<128x128xbf16, #tpu.memory_space<vmem>>, %arg5: memref<3x128xf32, #tpu.memory_space<vmem>>, %arg6: memref<8x128xf32, #tpu.memory_space<vmem>>) attributes {dimension_semantics = [#tpu.dimension_semantics<parallel>], iteration_bounds = array<i64: 1>, scalar_prefetch = 0 : i64, scratch_operands = 0 : i64, tpu.core_type = #tpu.core_type<tc>, window_params = [{transform_indices = @transform_0, window_bounds = array<i64: 8, 16>}, {pipeline_mode = #tpu.pipeline_mode<synchronous>, transform_indices = @transform_1, window_bounds = array<i64: 16, 128>}, {pipeline_mode = #tpu.pipeline_mode<synchronous>, transform_indices = @transform_2, window_bounds = array<i64: 128, 128>}, {pipeline_mode = #tpu.pipeline_mode<synchronous>, transform_indices = @transform_3, window_bounds = array<i64: 128, 128>}, {pipeline_mode = #tpu.pipeline_mode<synchronous>, transform_indices = @transform_4, window_bounds = array<i64: 3, 128>}, {transform_indices = @transform_5, window_bounds = array<i64: 8, 128>}]} {
    %c0 = arith.constant 0 : index
    %c0_0 = arith.constant 0 : index
    %0 = vector.load %arg1[%c0, %c0_0] : memref<8x16xf32, #tpu.memory_space<vmem>>, vector<8x16xf32>
    %c0_1 = arith.constant 0 : index
    %c0_2 = arith.constant 0 : index
    %1 = vector.load %arg2[%c0_1, %c0_2] : memref<16x128xbf16, #tpu.memory_space<vmem>>, vector<16x128xbf16>
    %c0_3 = arith.constant 0 : index
    %c0_4 = arith.constant 0 : index
    %2 = vector.load %arg5[%c0_3, %c0_4] : memref<3x128xf32, #tpu.memory_space<vmem>>, vector<1x128xf32>
    %3 = arith.truncf %0 : vector<8x16xf32> to vector<8x16xbf16>
    %cst = arith.constant dense<0.000000e+00> : vector<8x128xf32>
    %4 = tpu.matmul %3, %1, %cst {dimension_numbers = #tpu.dot_dimension_numbers<[1], [0], [0], [1], [0, 0, 1, 1], [], []>} : vector<8x16xbf16>, vector<16x128xbf16>, vector<8x128xf32> -> vector<8x128xf32>
    %5 = vector.broadcast %2 : vector<1x128xf32> to vector<8x128xf32>
    %6 = arith.addf %4, %5 : vector<8x128xf32>
    %cst_5 = arith.constant 0.00999999977 : f32
    %7 = vector.broadcast %cst_5 : f32 to vector<8x128xf32>
    %8 = arith.mulf %7, %6 : vector<8x128xf32>
    %9 = arith.maximumf %6, %8 : vector<8x128xf32>
    %c0_6 = arith.constant 0 : index
    %c0_7 = arith.constant 0 : index
    %10 = vector.load %arg3[%c0_6, %c0_7] : memref<128x128xbf16, #tpu.memory_space<vmem>>, vector<128x128xbf16>
    %c1 = arith.constant 1 : index
    %c0_8 = arith.constant 0 : index
    %11 = vector.load %arg5[%c1, %c0_8] : memref<3x128xf32, #tpu.memory_space<vmem>>, vector<1x128xf32>
    %12 = arith.truncf %9 : vector<8x128xf32> to vector<8x128xbf16>
    %cst_9 = arith.constant dense<0.000000e+00> : vector<8x128xf32>
    %13 = tpu.matmul %12, %10, %cst_9 {dimension_numbers = #tpu.dot_dimension_numbers<[1], [0], [0], [1], [0, 0, 1, 1], [], []>} : vector<8x128xbf16>, vector<128x128xbf16>, vector<8x128xf32> -> vector<8x128xf32>
    %14 = vector.broadcast %11 : vector<1x128xf32> to vector<8x128xf32>
    %15 = arith.addf %13, %14 : vector<8x128xf32>
    %cst_10 = arith.constant 0.00999999977 : f32
    %16 = vector.broadcast %cst_10 : f32 to vector<8x128xf32>
    %17 = arith.mulf %16, %15 : vector<8x128xf32>
    %18 = arith.maximumf %15, %17 : vector<8x128xf32>
    %c0_11 = arith.constant 0 : index
    %c0_12 = arith.constant 0 : index
    %19 = vector.load %arg4[%c0_11, %c0_12] : memref<128x128xbf16, #tpu.memory_space<vmem>>, vector<128x128xbf16>
    %c2 = arith.constant 2 : index
    %c0_13 = arith.constant 0 : index
    %20 = vector.load %arg5[%c2, %c0_13] : memref<3x128xf32, #tpu.memory_space<vmem>>, vector<1x128xf32>
    %21 = arith.truncf %18 : vector<8x128xf32> to vector<8x128xbf16>
    %cst_14 = arith.constant dense<0.000000e+00> : vector<8x128xf32>
    %22 = tpu.matmul %21, %19, %cst_14 {dimension_numbers = #tpu.dot_dimension_numbers<[1], [0], [0], [1], [0, 0, 1, 1], [], []>} : vector<8x128xbf16>, vector<128x128xbf16>, vector<8x128xf32> -> vector<8x128xf32>
    %23 = vector.broadcast %20 : vector<1x128xf32> to vector<8x128xf32>
    %24 = arith.addf %22, %23 : vector<8x128xf32>
    %c0_15 = arith.constant 0 : index
    %c0_16 = arith.constant 0 : index
    %25 = vector.load %arg6[%c0_15, %c0_16] : memref<8x128xf32, #tpu.memory_space<vmem>>, vector<8x128xf32>
    tpu.vector_store %arg6[%c0_15, %c0_16], %24 {strides = array<i32>} : memref<8x128xf32, #tpu.memory_space<vmem>>, vector<8x128xf32>,
    return
  }
  func.func @transform_0(%arg0: i32) -> (i32, i32) {
    %c0_i32 = arith.constant 0 : i32
    %c0_i32_0 = arith.constant 0 : i32
    return %arg0, %c0_i32 : i32, i32
  }
  func.func @transform_1(%arg0: i32) -> (i32, i32) {
    %c0_i32 = arith.constant 0 : i32
    %c0_i32_0 = arith.constant 0 : i32
    %c0_i32_1 = arith.constant 0 : i32
    return %c0_i32, %c0_i32_0 : i32, i32
  }
  func.func @transform_2(%arg0: i32) -> (i32, i32) {
    %c0_i32 = arith.constant 0 : i32
    %c0_i32_0 = arith.constant 0 : i32
    %c0_i32_1 = arith.constant 0 : i32
    return %c0_i32, %c0_i32_0 : i32, i32
  }
  func.func @transform_3(%arg0: i32) -> (i32, i32) {
    %c0_i32 = arith.constant 0 : i32
    %c0_i32_0 = arith.constant 0 : i32
    %c0_i32_1 = arith.constant 0 : i32
    return %c0_i32, %c0_i32_0 : i32, i32
  }
  func.func @transform_4(%arg0: i32) -> (i32, i32) {
    %c0_i32 = arith.constant 0 : i32
    %c0_i32_0 = arith.constant 0 : i32
    %c0_i32_1 = arith.constant 0 : i32
    return %c0_i32, %c0_i32_0 : i32, i32
  }
  func.func @transform_5(%arg0: i32) -> (i32, i32) {
    %c0_i32 = arith.constant 0 : i32
    %c0_i32_0 = arith.constant 0 : i32
    return %arg0, %c0_i32 : i32, i32
  }
}

</mosaic_0001>

<llo_original>
// kernel: _mlp_forward_impl.1
$region0: #{_mlp_forward_impl.1}
  #allocation0 [shape = 'u32[]', space=smem, size = 0x4, offset = 0x4, fixed_abs, tag = 'smem constant byte address 0x4 - core index']
  #allocation1 [shape = 'u32[144,128]{1,0:T(1,128)}', space=vmem, size = 0x12000, scoped, tag = 'internal scratch']
  %s0 = inlined_call_operand.vmem [shape: f32[8,16], index: 0, kind: input, shape index: {}]
  %s1 = inlined_call_operand.hbm [shape: bf16[16,128], index: 1, kind: input, shape index: {}]
  %s2 = inlined_call_operand.hbm [shape: bf16[128,128], index: 2, kind: input, shape index: {}]
  %s3 = inlined_call_operand.hbm [shape: bf16[128,128], index: 3, kind: input, shape index: {}]
  %s4 = inlined_call_operand.vmem [shape: f32[3,128], index: 4, kind: input, shape index: {}]
  %s5 = inlined_call_operand.hbm [shape: f32[8,128], index: 5, kind: output, shape index: {}]
  %s6 = sld [smem:[#allocation0]]
  $region42: #{_mlp_forward_impl.1} parent=0
    _
  %s8 = ssub.s32 1, %s6
  %s9 = scalar_select 0, %s8, %s6
  $region1: #{_mlp_forward_impl.1} parent=0
    #allocation2 [shape = 'u8[4096]{0}', space=vmem, size = 0x1000, scoped, tag = 'input window, operand 1, single buffered']
    #allocation3 [shape = 's32[1]{0}', space=sflag, size = 0x4, scoped, tag = 'scoped memory for _mlp_forward_impl.1']
    #allocation4 [shape = 's32[1]{0}', space=sflag, size = 0x4, scoped, tag = 'scoped memory for _mlp_forward_impl.1']
    #allocation5 [shape = 'u8[32768]{0}', space=vmem, size = 0x8000, scoped, tag = 'input window, operand 2, single buffered']
    #allocation6 [shape = 's32[1]{0}', space=sflag, size = 0x4, scoped, tag = 'scoped memory for _mlp_forward_impl.1']
    #allocation7 [shape = 'u8[32768]{0}', space=vmem, size = 0x8000, scoped, tag = 'input window, operand 3, single buffered']
    #allocation8 [shape = 'u8[4096]{0}', space=vmem, size = 0x1000, scoped, tag = 'output window, operand 0, single buffered']
    %10 = vsyncpa [#allocation3], 0
    %11 = vsyncpa [#allocation6], 0
    %12 = vsyncpa [#allocation4], 0
    // Predicated region
    $region2: #{_mlp_forward_impl.1} parent=1 // pred_check
      _
    $region3: #{_mlp_forward_impl.1} parent=1 // pred_check_branch
      %14 = sbr.rel (0) target = $region5
    $region4: #{_mlp_forward_impl.1} parent=1 // pred_region
      _
    $region5: #{_mlp_forward_impl.1} parent=1 // pred_fallthru
      _
    // Predicated region
    $region6: #{_mlp_forward_impl.1} parent=1 // pred_check
      _
    $region7: #{_mlp_forward_impl.1} parent=1 // pred_check_branch
      %16 = sbr.rel (0) target = $region9
    $region8: #{_mlp_forward_impl.1} parent=1 // pred_region
      %s18 = ssub.s32 128, 128
      %19 = vsyncadd [#allocation3], %s18
      %s20 = sshll.u32 [#allocation2], 4
      %s21 = int_to_ptr.vmem [resolvable:$true] %s20
      %26 = dma.hbm_to_vmem [thread:$0]  %s1, 128, %s21, [#allocation3], 64, 64, 4
    $region9: #{_mlp_forward_impl.1} parent=1 // pred_fallthru
      _
    // Predicated region
    $region10: #{_mlp_forward_impl.1} parent=1 // pred_check
      _
    $region11: #{_mlp_forward_impl.1} parent=1 // pred_check_branch
      %28 = sbr.rel (0) target = $region13
    $region12: #{_mlp_forward_impl.1} parent=1 // pred_region
      %s30 = ssub.s32 1024, 1024
      %31 = vsyncadd [#allocation6], %s30
      %s32 = sshll.u32 [#allocation5], 4
      %s33 = int_to_ptr.vmem [resolvable:$true] %s32
      %38 = dma.hbm_to_vmem [thread:$0]  %s2, 1024, %s33, [#allocation6], 64, 64, 4
    $region13: #{_mlp_forward_impl.1} parent=1 // pred_fallthru
      _
    // Predicated region
    $region14: #{_mlp_forward_impl.1} parent=1 // pred_check
      _
    $region15: #{_mlp_forward_impl.1} parent=1 // pred_check_branch
      %40 = sbr.rel (0) target = $region17
    $region16: #{_mlp_forward_impl.1} parent=1 // pred_region
      %s42 = ssub.s32 1024, 1024
      %43 = vsyncadd [#allocation6], %s42
      %s44 = sshll.u32 [#allocation7], 4
      %s45 = int_to_ptr.vmem [resolvable:$true] %s44
      %50 = dma.hbm_to_vmem [thread:$0]  %s3, 1024, %s45, [#allocation6], 64, 64, 4
    $region17: #{_mlp_forward_impl.1} parent=1 // pred_fallthru
      _
    // Predicated region
    $region18: #{_mlp_forward_impl.1} parent=1 // pred_check
      _
    $region19: #{_mlp_forward_impl.1} parent=1 // pred_check_branch
      %52 = sbr.rel (0) target = $region21
    $region20: #{_mlp_forward_impl.1} parent=1 // pred_region
      _
    $region21: #{_mlp_forward_impl.1} parent=1 // pred_fallthru
      _
    // Predicated region
    $region22: #{_mlp_forward_impl.1} parent=1 // pred_check
      _
    $region23: #{_mlp_forward_impl.1} parent=1 // pred_check_branch
      %54 = sbr.rel (0) target = $region25
    $region24: #{_mlp_forward_impl.1} parent=1 // pred_region
      %55 = dma.done [#allocation3], 128
    $region25: #{_mlp_forward_impl.1} parent=1 // pred_fallthru
      _
    // Predicated region
    $region26: #{_mlp_forward_impl.1} parent=1 // pred_check
      _
    $region27: #{_mlp_forward_impl.1} parent=1 // pred_check_branch
      %57 = sbr.rel (0) target = $region29
    $region28: #{_mlp_forward_impl.1} parent=1 // pred_region
      %58 = dma.done [#allocation6], 1024
    $region29: #{_mlp_forward_impl.1} parent=1 // pred_fallthru
      _
    // Predicated region
    $region30: #{_mlp_forward_impl.1} parent=1 // pred_check
      _
    $region31: #{_mlp_forward_impl.1} parent=1 // pred_check_branch
      %60 = sbr.rel (0) target = $region33
    $region32: #{_mlp_forward_impl.1} parent=1 // pred_region
      %61 = dma.done [#allocation6], 1024
    $region33: #{_mlp_forward_impl.1} parent=1 // pred_fallthru
      _
    %v63 = vld [vmem:[%s0] sm:$0xff]
    %v64 = vld [vmem:[#allocation2] sm:$0xf]
    %v65 = vld [vmem:[#allocation2 + $0x4] sm:$0xf]
    %v66 = vld [vmem:[%s4] sm:$0x1]
    %v67 = vpack.c.bf16 %v63, %v63
    %v68 = vlaneseq
    %v69 = vshrl.u32 %v68, 7
    %v70 = vsub.s32 0, %v69
    %v71 = vrot.slane %v66, %v70
    %v74 = vunpack.c.l.b16 %v64
    %v75 = vunpack.c.l.b16 %v65
    %v76 = vpack.c.b16 %v75, %v74
    %vm78 = vcmask 130048
    %v80 = vsel %vm78, %v67, 0
    %82 = vmatprep.subr.bf16.mxu0 0
    %83 = vmatpush1.bf16.msra.mxu0 %v76
    %84 = vmatprep.subr.bf16.mxu0 0
    %85 = vmatpush1.bf16.msra.mxu0 0
    %86 = vmatprep.subr.bf16.mxu0 0
    %87 = vmatpush1.bf16.msra.mxu0 0
    %88 = vmatprep.subr.bf16.mxu0 0
    %89 = vmatpush1.bf16.msra.mxu0 0
    %90 = vmatprep.subr.bf16.mxu0 0
    %91 = vmatpush1.bf16.msra.mxu0 0
    %92 = vmatprep.subr.bf16.mxu0 0
    %93 = vmatpush1.bf16.msra.mxu0 0
    %94 = vmatprep.subr.bf16.mxu0 0
    %95 = vmatpush1.bf16.msra.mxu0 0
    %96 = vmatprep.subr.bf16.mxu0 0
    %97 = vmatpush1.bf16.msra.mxu0 0
    %98 = vmatprep.subr.bf16.mxu0 0
    %99 = vmatpush1.bf16.msra.mxu0 0
    %100 = vmatprep.subr.bf16.mxu0 0
    %101 = vmatpush1.bf16.msra.mxu0 0
    %102 = vmatprep.subr.bf16.mxu0 0
    %103 = vmatpush1.bf16.msra.mxu0 0
    %104 = vmatprep.subr.bf16.mxu0 0
    %105 = vmatpush1.bf16.msra.mxu0 0
    %106 = vmatprep.subr.bf16.mxu0 0
    %107 = vmatpush1.bf16.msra.mxu0 0
    %108 = vmatprep.subr.bf16.mxu0 0
    %109 = vmatpush1.bf16.msra.mxu0 0
    %110 = vmatprep.subr.bf16.mxu0 0
    %111 = vmatpush1.bf16.msra.mxu0 0
    %112 = vmatprep.subr.bf16.mxu0 0
    %113 = vmatpush1.bf16.msra.mxu0 0
    %114 = vmatprep.mubr.bf16.mxu0 0
    %115 = vmatmul.mubr.bf16.gmra.mrb[0].mxu0 %v80
    %v116 = vpop.f32.mrb[0].mxu0
    %v117 = vadd.f32 %v71, %v116
    %v118 = vpop.f32.mrb[0].mxu0
    %v119 = vpop.f32.mrb[0].mxu0
    %v120 = vpop.f32.mrb[0].mxu0
    %121 = vdwg.mxu0
    %v122 = vmul.f32 %v117, 0.01
    %v123 = vmax.f32 %v117, %v122
    %v124 = vld [vmem:[#allocation5] sm:$0xf]
    %v125 = vld [vmem:[#allocation5 + $0x4] sm:$0xf]
    %v126 = vld [vmem:[#allocation5 + $0x8] sm:$0xf]
    %v127 = vld [vmem:[#allocation5 + $0xc] sm:$0xf]
    %v128 = vld [vmem:[#allocation5 + $0x10] sm:$0xf]
    %v129 = vld [vmem:[#allocation5 + $0x14] sm:$0xf]
    %v130 = vld [vmem:[#allocation5 + $0x18] sm:$0xf]
    %v131 = vld [vmem:[#allocation5 + $0x1c] sm:$0xf]
    %v132 = vld [vmem:[#allocation5 + $0x20] sm:$0xf]
    %v133 = vld [vmem:[#allocation5 + $0x24] sm:$0xf]
    %v134 = vld [vmem:[#allocation5 + $0x28] sm:$0xf]
    %v135 = vld [vmem:[#allocation5 + $0x2c] sm:$0xf]
    %v136 = vld [vmem:[#allocation5 + $0x30] sm:$0xf]
    %v137 = vld [vmem:[#allocation5 + $0x34] sm:$0xf]
    %v138 = vld [vmem:[#allocation5 + $0x38] sm:$0xf]
    %v139 = vld [vmem:[#allocation5 + $0x3c] sm:$0xf]
    %v140 = vld [vmem:[%s4 + $0x1] sm:$0x1]
    %v141 = vpack.c.bf16 %v123, %v123
    %v142 = vlaneseq
    %v143 = vshrl.u32 %v142, 7
    %v144 = vsub.s32 0, %v143
    %v145 = vrot.slane %v140, %v144
    %v162 = vunpack.c.l.b16 %v124
    %v163 = vunpack.c.l.b16 %v125
    %v164 = vunpack.c.l.b16 %v126
    %v165 = vunpack.c.l.b16 %v127
    %v166 = vunpack.c.l.b16 %v128
    %v167 = vunpack.c.l.b16 %v129
    %v168 = vunpack.c.l.b16 %v130
    %v169 = vunpack.c.l.b16 %v131
    %v170 = vunpack.c.l.b16 %v132
    %v171 = vunpack.c.l.b16 %v133
    %v172 = vunpack.c.l.b16 %v134
    %v173 = vunpack.c.l.b16 %v135
    %v174 = vunpack.c.l.b16 %v136
    %v175 = vunpack.c.l.b16 %v137
    %v176 = vunpack.c.l.b16 %v138
    %v177 = vunpack.c.l.b16 %v139
    %v178 = vpack.c.b16 %v163, %v162
    %v179 = vpack.c.b16 %v165, %v164
    %v180 = vpack.c.b16 %v167, %v166
    %v181 = vpack.c.b16 %v169, %v168
    %v182 = vpack.c.b16 %v171, %v170
    %v183 = vpack.c.b16 %v173, %v172
    %v184 = vpack.c.b16 %v175, %v174
    %v185 = vpack.c.b16 %v177, %v176
    %194 = vmatprep.subr.bf16.mxu0 0
    %195 = vmatpush1.bf16.msra.mxu0 %v178
    %196 = vmatprep.subr.bf16.mxu0 0
    %197 = vmatpush1.bf16.msra.mxu0 %v179
    %198 = vmatprep.subr.bf16.mxu0 0
    %199 = vmatpush1.bf16.msra.mxu0 %v180
    %200 = vmatprep.subr.bf16.mxu0 0
    %201 = vmatpush1.bf16.msra.mxu0 %v181
    %202 = vmatprep.subr.bf16.mxu0 0
    %203 = vmatpush1.bf16.msra.mxu0 %v182
    %204 = vmatprep.subr.bf16.mxu0 0
    %205 = vmatpush1.bf16.msra.mxu0 %v183
    %206 = vmatprep.subr.bf16.mxu0 0
    %207 = vmatpush1.bf16.msra.mxu0 %v184
    %208 = vmatprep.subr.bf16.mxu0 0
    %209 = vmatpush1.bf16.msra.mxu0 %v185
    %210 = vmatprep.subr.bf16.mxu0 0
    %211 = vmatpush1.bf16.msra.mxu0 0
    %212 = vmatprep.subr.bf16.mxu0 0
    %213 = vmatpush1.bf16.msra.mxu0 0
    %214 = vmatprep.subr.bf16.mxu0 0
    %215 = vmatpush1.bf16.msra.mxu0 0
    %216 = vmatprep.subr.bf16.mxu0 0
    %217 = vmatpush1.bf16.msra.mxu0 0
    %218 = vmatprep.subr.bf16.mxu0 0
    %219 = vmatpush1.bf16.msra.mxu0 0
    %220 = vmatprep.subr.bf16.mxu0 0
    %221 = vmatpush1.bf16.msra.mxu0 0
    %222 = vmatprep.subr.bf16.mxu0 0
    %223 = vmatpush1.bf16.msra.mxu0 0
    %224 = vmatprep.subr.bf16.mxu0 0
    %225 = vmatpush1.bf16.msra.mxu0 0
    %226 = vmatprep.mubr.bf16.mxu0 0
    %227 = vmatmul.mubr.bf16.gmra.mrb[0].mxu0 %v141
    %v228 = vpop.f32.mrb[0].mxu0
    %v229 = vadd.f32 %v145, %v228
    %v230 = vpop.f32.mrb[0].mxu0
    %v231 = vpop.f32.mrb[0].mxu0
    %v232 = vpop.f32.mrb[0].mxu0
    %233 = vdwg.mxu0
    %v234 = vmul.f32 %v229, 0.01
    %v235 = vmax.f32 %v229, %v234
    %v236 = vld [vmem:[#allocation7] sm:$0xf]
    %v237 = vld [vmem:[#allocation7 + $0x4] sm:$0xf]
    %v238 = vld [vmem:[#allocation7 + $0x8] sm:$0xf]
    %v239 = vld [vmem:[#allocation7 + $0xc] sm:$0xf]
    %v240 = vld [vmem:[#allocation7 + $0x10] sm:$0xf]
    %v241 = vld [vmem:[#allocation7 + $0x14] sm:$0xf]
    %v242 = vld [vmem:[#allocation7 + $0x18] sm:$0xf]
    %v243 = vld [vmem:[#allocation7 + $0x1c] sm:$0xf]
    %v244 = vld [vmem:[#allocation7 + $0x20] sm:$0xf]
    %v245 = vld [vmem:[#allocation7 + $0x24] sm:$0xf]
    %v246 = vld [vmem:[#allocation7 + $0x28] sm:$0xf]
    %v247 = vld [vmem:[#allocation7 + $0x2c] sm:$0xf]
    %v248 = vld [vmem:[#allocation7 + $0x30] sm:$0xf]
    %v249 = vld [vmem:[#allocation7 + $0x34] sm:$0xf]
    %v250 = vld [vmem:[#allocation7 + $0x38] sm:$0xf]
    %v251 = vld [vmem:[#allocation7 + $0x3c] sm:$0xf]
    %v252 = vld [vmem:[%s4 + $0x2] sm:$0x1]
    %v253 = vpack.c.bf16 %v235, %v235
    %v254 = vlaneseq
    %v255 = vshrl.u32 %v254, 7
    %v256 = vsub.s32 0, %v255
    %v257 = vrot.slane %v252, %v256
    %v274 = vunpack.c.l.b16 %v236
    %v275 = vunpack.c.l.b16 %v237
    %v276 = vunpack.c.l.b16 %v238
    %v277 = vunpack.c.l.b16 %v239
    %v278 = vunpack.c.l.b16 %v240
    %v279 = vunpack.c.l.b16 %v241
    %v280 = vunpack.c.l.b16 %v242
    %v281 = vunpack.c.l.b16 %v243
    %v282 = vunpack.c.l.b16 %v244
    %v283 = vunpack.c.l.b16 %v245
    %v284 = vunpack.c.l.b16 %v246
    %v285 = vunpack.c.l.b16 %v247
    %v286 = vunpack.c.l.b16 %v248
    %v287 = vunpack.c.l.b16 %v249
    %v288 = vunpack.c.l.b16 %v250
    %v289 = vunpack.c.l.b16 %v251
    %v290 = vpack.c.b16 %v275, %v274
    %v291 = vpack.c.b16 %v277, %v276
    %v292 = vpack.c.b16 %v279, %v278
    %v293 = vpack.c.b16 %v281, %v280
    %v294 = vpack.c.b16 %v283, %v282
    %v295 = vpack.c.b16 %v285, %v284
    %v296 = vpack.c.b16 %v287, %v286
    %v297 = vpack.c.b16 %v289, %v288
    %306 = vmatprep.subr.bf16.mxu0 0
    %307 = vmatpush1.bf16.msra.mxu0 %v290
    %308 = vmatprep.subr.bf16.mxu0 0
    %309 = vmatpush1.bf16.msra.mxu0 %v291
    %310 = vmatprep.subr.bf16.mxu0 0
    %311 = vmatpush1.bf16.msra.mxu0 %v292
    %312 = vmatprep.subr.bf16.mxu0 0
    %313 = vmatpush1.bf16.msra.mxu0 %v293
    %314 = vmatprep.subr.bf16.mxu0 0
    %315 = vmatpush1.bf16.msra.mxu0 %v294
    %316 = vmatprep.subr.bf16.mxu0 0
    %317 = vmatpush1.bf16.msra.mxu0 %v295
    %318 = vmatprep.subr.bf16.mxu0 0
    %319 = vmatpush1.bf16.msra.mxu0 %v296
    %320 = vmatprep.subr.bf16.mxu0 0
    %321 = vmatpush1.bf16.msra.mxu0 %v297
    %322 = vmatprep.subr.bf16.mxu0 0
    %323 = vmatpush1.bf16.msra.mxu0 0
    %324 = vmatprep.subr.bf16.mxu0 0
    %325 = vmatpush1.bf16.msra.mxu0 0
    %326 = vmatprep.subr.bf16.mxu0 0
    %327 = vmatpush1.bf16.msra.mxu0 0
    %328 = vmatprep.subr.bf16.mxu0 0
    %329 = vmatpush1.bf16.msra.mxu0 0
    %330 = vmatprep.subr.bf16.mxu0 0
    %331 = vmatpush1.bf16.msra.mxu0 0
    %332 = vmatprep.subr.bf16.mxu0 0
    %333 = vmatpush1.bf16.msra.mxu0 0
    %334 = vmatprep.subr.bf16.mxu0 0
    %335 = vmatpush1.bf16.msra.mxu0 0
    %336 = vmatprep.subr.bf16.mxu0 0
    %337 = vmatpush1.bf16.msra.mxu0 0
    %338 = vmatprep.mubr.bf16.mxu0 0
    %339 = vmatmul.mubr.bf16.gmra.mrb[0].mxu0 %v253
    %v340 = vpop.f32.mrb[0].mxu0
    %v341 = vadd.f32 %v257, %v340
    %v342 = vpop.f32.mrb[0].mxu0
    %v343 = vpop.f32.mrb[0].mxu0
    %v344 = vpop.f32.mrb[0].mxu0
    %345 = vdwg.mxu0
    %346 = vst [vmem:[#allocation8] sm:$0xff] %v341
    // Predicated region
    $region34: #{_mlp_forward_impl.1} parent=1 // pred_check
      _
    $region35: #{_mlp_forward_impl.1} parent=1 // pred_check_branch
      %348 = sbr.rel (0) target = $region37
    $region36: #{_mlp_forward_impl.1} parent=1 // pred_region
      %s350 = ssub.s32 128, 128
      %351 = vsyncadd [#allocation4], %s350
      %s353 = sshll.u32 [#allocation8], 4
      %s354 = int_to_ptr.vmem [resolvable:$true] %s353
      %356 = dma.vmem_to_hbm [thread:$0]  %s354, 128, %s5, [#allocation4]
    $region37: #{_mlp_forward_impl.1} parent=1 // pred_fallthru
      _
    // Predicated region
    $region38: #{_mlp_forward_impl.1} parent=1 // pred_check
      _
    $region39: #{_mlp_forward_impl.1} parent=1 // pred_check_branch
      %358 = sbr.rel (0) target = $region41
    $region40: #{_mlp_forward_impl.1} parent=1 // pred_region
      %359 = dma.done [#allocation4], 128
    $region41: #{_mlp_forward_impl.1} parent=1 // pred_fallthru
      _
    %360 = vsyncpa [#allocation3], 1
    %361 = vsyncpa [#allocation6], 1
    %362 = vsyncpa [#allocation4], 1

// kernel: _mlp_forward_impl.1
$region0: #{_mlp_forward_impl.1}
  #allocation0 [shape = 'u32[]', space=smem, size = 0x4, offset = 0x4, fixed_abs, tag = 'smem constant byte address 0x4 - core index']
  #allocation1 [shape = 'u32[144,128]{1,0:T(1,128)}', space=vmem, size = 0x12000, scoped, tag = 'internal scratch']
  %s0 = inlined_call_operand.vmem [shape: f32[8,16], index: 0, kind: input, shape index: {}]
  %s1 = inlined_call_operand.hbm [shape: bf16[16,128], index: 1, kind: input, shape index: {}]
  %s2 = inlined_call_operand.hbm [shape: bf16[128,128], index: 2, kind: input, shape index: {}]
  %s3 = inlined_call_operand.hbm [shape: bf16[128,128], index: 3, kind: input, shape index: {}]
  %s4 = inlined_call_operand.vmem [shape: f32[3,128], index: 4, kind: input, shape index: {}]
  %s5 = inlined_call_operand.hbm [shape: f32[8,128], index: 5, kind: output, shape index: {}]
  %s6 = sld [smem:[#allocation0]]
  $region42: #{_mlp_forward_impl.1} parent=0
    _
  %s8 = ssub.s32 1, %s6
  %s9 = scalar_select 0, %s8, %s6
  $region1: #{_mlp_forward_impl.1} parent=0
    #allocation2 [shape = 'u8[4096]{0}', space=vmem, size = 0x1000, scoped, tag = 'input window, operand 1, single buffered']
    #allocation3 [shape = 's32[1]{0}', space=sflag, size = 0x4, scoped, tag = 'scoped memory for _mlp_forward_impl.1']
    #allocation4 [shape = 's32[1]{0}', space=sflag, size = 0x4, scoped, tag = 'scoped memory for _mlp_forward_impl.1']
    #allocation5 [shape = 'u8[32768]{0}', space=vmem, size = 0x8000, scoped, tag = 'input window, operand 2, single buffered']
    #allocation6 [shape = 's32[1]{0}', space=sflag, size = 0x4, scoped, tag = 'scoped memory for _mlp_forward_impl.1']
    #allocation7 [shape = 'u8[32768]{0}', space=vmem, size = 0x8000, scoped, tag = 'input window, operand 3, single buffered']
    #allocation8 [shape = 'u8[4096]{0}', space=vmem, size = 0x1000, scoped, tag = 'output window, operand 0, single buffered']
    %10 = vsyncpa [#allocation3], 0
    %11 = vsyncpa [#allocation6], 0
    %12 = vsyncpa [#allocation4], 0
    // Predicated region
    $region2: #{_mlp_forward_impl.1} parent=1 // pred_check
      _
    $region3: #{_mlp_forward_impl.1} parent=1 // pred_check_branch
      %14 = sbr.rel (0) target = $region5
    $region4: #{_mlp_forward_impl.1} parent=1 // pred_region
      _
    $region5: #{_mlp_forward_impl.1} parent=1 // pred_fallthru
      _
    // Predicated region
    $region6: #{_mlp_forward_impl.1} parent=1 // pred_check
      _
    $region7: #{_mlp_forward_impl.1} parent=1 // pred_check_branch
      %16 = sbr.rel (0) target = $region9
    $region8: #{_mlp_forward_impl.1} parent=1 // pred_region
      %s18 = ssub.s32 128, 128
      %19 = vsyncadd [#allocation3], %s18
      %s20 = sshll.u32 [#allocation2], 4
      %s21 = int_to_ptr.vmem [resolvable:$true] %s20
      %26 = dma.hbm_to_vmem [thread:$0]  %s1, 128, %s21, [#allocation3], 64, 64, 4
    $region9: #{_mlp_forward_impl.1} parent=1 // pred_fallthru
      _
    // Predicated region
    $region10: #{_mlp_forward_impl.1} parent=1 // pred_check
      _
    $region11: #{_mlp_forward_impl.1} parent=1 // pred_check_branch
      %28 = sbr.rel (0) target = $region13
    $region12: #{_mlp_forward_impl.1} parent=1 // pred_region
      %s30 = ssub.s32 1024, 1024
      %31 = vsyncadd [#allocation6], %s30
      %s32 = sshll.u32 [#allocation5], 4
      %s33 = int_to_ptr.vmem [resolvable:$true] %s32
      %38 = dma.hbm_to_vmem [thread:$0]  %s2, 1024, %s33, [#allocation6], 64, 64, 4
    $region13: #{_mlp_forward_impl.1} parent=1 // pred_fallthru
      _
    // Predicated region
    $region14: #{_mlp_forward_impl.1} parent=1 // pred_check
      _
    $region15: #{_mlp_forward_impl.1} parent=1 // pred_check_branch
      %40 = sbr.rel (0) target = $region17
    $region16: #{_mlp_forward_impl.1} parent=1 // pred_region
      %s42 = ssub.s32 1024, 1024
      %43 = vsyncadd [#allocation6], %s42
      %s44 = sshll.u32 [#allocation7], 4
      %s45 = int_to_ptr.vmem [resolvable:$true] %s44
      %50 = dma.hbm_to_vmem [thread:$0]  %s3, 1024, %s45, [#allocation6], 64, 64, 4
    $region17: #{_mlp_forward_impl.1} parent=1 // pred_fallthru
      _
    // Predicated region
    $region18: #{_mlp_forward_impl.1} parent=1 // pred_check
      _
    $region19: #{_mlp_forward_impl.1} parent=1 // pred_check_branch
      %52 = sbr.rel (0) target = $region21
    $region20: #{_mlp_forward_impl.1} parent=1 // pred_region
      _
    $region21: #{_mlp_forward_impl.1} parent=1 // pred_fallthru
      _
    // Predicated region
    $region22: #{_mlp_forward_impl.1} parent=1 // pred_check
      _
    $region23: #{_mlp_forward_impl.1} parent=1 // pred_check_branch
      %54 = sbr.rel (0) target = $region25
    $region24: #{_mlp_forward_impl.1} parent=1 // pred_region
      %55 = dma.done [#allocation3], 128
    $region25: #{_mlp_forward_impl.1} parent=1 // pred_fallthru
      _
    // Predicated region
    $region26: #{_mlp_forward_impl.1} parent=1 // pred_check
      _
    $region27: #{_mlp_forward_impl.1} parent=1 // pred_check_branch
      %57 = sbr.rel (0) target = $region29
    $region28: #{_mlp_forward_impl.1} parent=1 // pred_region
      %58 = dma.done [#allocation6], 1024
    $region29: #{_mlp_forward_impl.1} parent=1 // pred_fallthru
      _
    // Predicated region
    $region30: #{_mlp_forward_impl.1} parent=1 // pred_check
      _
    $region31: #{_mlp_forward_impl.1} parent=1 // pred_check_branch
      %60 = sbr.rel (0) target = $region33
    $region32: #{_mlp_forward_impl.1} parent=1 // pred_region
      %61 = dma.done [#allocation6], 1024
    $region33: #{_mlp_forward_impl.1} parent=1 // pred_fallthru
      _
    %v63 = vld [vmem:[%s0] sm:$0xff]
    %v64 = vld [vmem:[#allocation2] sm:$0xf]
    %v65 = vld [vmem:[#allocation2 + $0x4] sm:$0xf]
    %v66 = vld [vmem:[%s4] sm:$0x1]
    %v67 = vpack.c.bf16 %v63, %v63
    %v68 = vlaneseq
    %v69 = vshrl.u32 %v68, 7
    %v70 = vsub.s32 0, %v69
    %v71 = vrot.slane %v66, %v70
    %v74 = vunpack.c.l.b16 %v64
    %v75 = vunpack.c.l.b16 %v65
    %v76 = vpack.c.b16 %v75, %v74
    %vm78 = vcmask 130048
    %v80 = vsel %vm78, %v67, 0
    %82 = vmatprep.subr.bf16.mxu0 0
    %83 = vmatpush1.bf16.msra.mxu0 %v76
    %84 = vmatprep.subr.bf16.mxu0 0
    %85 = vmatpush1.bf16.msra.mxu0 0
    %86 = vmatprep.subr.bf16.mxu0 0
    %87 = vmatpush1.bf16.msra.mxu0 0
    %88 = vmatprep.subr.bf16.mxu0 0
    %89 = vmatpush1.bf16.msra.mxu0 0
    %90 = vmatprep.subr.bf16.mxu0 0
    %91 = vmatpush1.bf16.msra.mxu0 0
    %92 = vmatprep.subr.bf16.mxu0 0
    %93 = vmatpush1.bf16.msra.mxu0 0
    %94 = vmatprep.subr.bf16.mxu0 0
    %95 = vmatpush1.bf16.msra.mxu0 0
    %96 = vmatprep.subr.bf16.mxu0 0
    %97 = vmatpush1.bf16.msra.mxu0 0
    %98 = vmatprep.subr.bf16.mxu0 0
    %99 = vmatpush1.bf16.msra.mxu0 0
    %100 = vmatprep.subr.bf16.mxu0 0
    %101 = vmatpush1.bf16.msra.mxu0 0
    %102 = vmatprep.subr.bf16.mxu0 0
    %103 = vmatpush1.bf16.msra.mxu0 0
    %104 = vmatprep.subr.bf16.mxu0 0
    %105 = vmatpush1.bf16.msra.mxu0 0
    %106 = vmatprep.subr.bf16.mxu0 0
    %107 = vmatpush1.bf16.msra.mxu0 0
    %108 = vmatprep.subr.bf16.mxu0 0
    %109 = vmatpush1.bf16.msra.mxu0 0
    %110 = vmatprep.subr.bf16.mxu0 0
    %111 = vmatpush1.bf16.msra.mxu0 0
    %112 = vmatprep.subr.bf16.mxu0 0
    %113 = vmatpush1.bf16.msra.mxu0 0
    %114 = vmatprep.mubr.bf16.mxu0 0
    %115 = vmatmul.mubr.bf16.gmra.mrb[0].mxu0 %v80
    %v116 = vpop.f32.mrb[0].mxu0
    %v117 = vadd.f32 %v71, %v116
    %v118 = vpop.f32.mrb[0].mxu0
    %v119 = vpop.f32.mrb[0].mxu0
    %v120 = vpop.f32.mrb[0].mxu0
    %121 = vdwg.mxu0
    %v122 = vmul.f32 %v117, 0.01
    %v123 = vmax.f32 %v117, %v122
    %v124 = vld [vmem:[#allocation5] sm:$0xf]
    %v125 = vld [vmem:[#allocation5 + $0x4] sm:$0xf]
    %v126 = vld [vmem:[#allocation5 + $0x8] sm:$0xf]
    %v127 = vld [vmem:[#allocation5 + $0xc] sm:$0xf]
    %v128 = vld [vmem:[#allocation5 + $0x10] sm:$0xf]
    %v129 = vld [vmem:[#allocation5 + $0x14] sm:$0xf]
    %v130 = vld [vmem:[#allocation5 + $0x18] sm:$0xf]
    %v131 = vld [vmem:[#allocation5 + $0x1c] sm:$0xf]
    %v132 = vld [vmem:[#allocation5 + $0x20] sm:$0xf]
    %v133 = vld [vmem:[#allocation5 + $0x24] sm:$0xf]
    %v134 = vld [vmem:[#allocation5 + $0x28] sm:$0xf]
    %v135 = vld [vmem:[#allocation5 + $0x2c] sm:$0xf]
    %v136 = vld [vmem:[#allocation5 + $0x30] sm:$0xf]
    %v137 = vld [vmem:[#allocation5 + $0x34] sm:$0xf]
    %v138 = vld [vmem:[#allocation5 + $0x38] sm:$0xf]
    %v139 = vld [vmem:[#allocation5 + $0x3c] sm:$0xf]
    %v140 = vld [vmem:[%s4 + $0x1] sm:$0x1]
    %v141 = vpack.c.bf16 %v123, %v123
    %v142 = vlaneseq
    %v143 = vshrl.u32 %v142, 7
    %v144 = vsub.s32 0, %v143
    %v145 = vrot.slane %v140, %v144
    %v162 = vunpack.c.l.b16 %v124
    %v163 = vunpack.c.l.b16 %v125
    %v164 = vunpack.c.l.b16 %v126
    %v165 = vunpack.c.l.b16 %v127
    %v166 = vunpack.c.l.b16 %v128
    %v167 = vunpack.c.l.b16 %v129
    %v168 = vunpack.c.l.b16 %v130
    %v169 = vunpack.c.l.b16 %v131
    %v170 = vunpack.c.l.b16 %v132
    %v171 = vunpack.c.l.b16 %v133
    %v172 = vunpack.c.l.b16 %v134
    %v173 = vunpack.c.l.b16 %v135
    %v174 = vunpack.c.l.b16 %v136
    %v175 = vunpack.c.l.b16 %v137
    %v176 = vunpack.c.l.b16 %v138
    %v177 = vunpack.c.l.b16 %v139
    %v178 = vpack.c.b16 %v163, %v162
    %v179 = vpack.c.b16 %v165, %v164
    %v180 = vpack.c.b16 %v167, %v166
    %v181 = vpack.c.b16 %v169, %v168
    %v182 = vpack.c.b16 %v171, %v170
    %v183 = vpack.c.b16 %v173, %v172
    %v184 = vpack.c.b16 %v175, %v174
    %v185 = vpack.c.b16 %v177, %v176
    %194 = vmatprep.subr.bf16.mxu0 0
    %195 = vmatpush1.bf16.msra.mxu0 %v178
    %196 = vmatprep.subr.bf16.mxu0 0
    %197 = vmatpush1.bf16.msra.mxu0 %v179
    %198 = vmatprep.subr.bf16.mxu0 0
    %199 = vmatpush1.bf16.msra.mxu0 %v180
    %200 = vmatprep.subr.bf16.mxu0 0
    %201 = vmatpush1.bf16.msra.mxu0 %v181
    %202 = vmatprep.subr.bf16.mxu0 0
    %203 = vmatpush1.bf16.msra.mxu0 %v182
    %204 = vmatprep.subr.bf16.mxu0 0
    %205 = vmatpush1.bf16.msra.mxu0 %v183
    %206 = vmatprep.subr.bf16.mxu0 0
    %207 = vmatpush1.bf16.msra.mxu0 %v184
    %208 = vmatprep.subr.bf16.mxu0 0
    %209 = vmatpush1.bf16.msra.mxu0 %v185
    %210 = vmatprep.subr.bf16.mxu0 0
    %211 = vmatpush1.bf16.msra.mxu0 0
    %212 = vmatprep.subr.bf16.mxu0 0
    %213 = vmatpush1.bf16.msra.mxu0 0
    %214 = vmatprep.subr.bf16.mxu0 0
    %215 = vmatpush1.bf16.msra.mxu0 0
    %216 = vmatprep.subr.bf16.mxu0 0
    %217 = vmatpush1.bf16.msra.mxu0 0
    %218 = vmatprep.subr.bf16.mxu0 0
    %219 = vmatpush1.bf16.msra.mxu0 0
    %220 = vmatprep.subr.bf16.mxu0 0
    %221 = vmatpush1.bf16.msra.mxu0 0
    %222 = vmatprep.subr.bf16.mxu0 0
    %223 = vmatpush1.bf16.msra.mxu0 0
    %224 = vmatprep.subr.bf16.mxu0 0
    %225 = vmatpush1.bf16.msra.mxu0 0
    %226 = vmatprep.mubr.bf16.mxu0 0
    %227 = vmatmul.mubr.bf16.gmra.mrb[0].mxu0 %v141
    %v228 = vpop.f32.mrb[0].mxu0
    %v229 = vadd.f32 %v145, %v228
    %v230 = vpop.f32.mrb[0].mxu0
    %v231 = vpop.f32.mrb[0].mxu0
    %v232 = vpop.f32.mrb[0].mxu0
    %233 = vdwg.mxu0
    %v234 = vmul.f32 %v229, 0.01
    %v235 = vmax.f32 %v229, %v234
    %v236 = vld [vmem:[#allocation7] sm:$0xf]
    %v237 = vld [vmem:[#allocation7 + $0x4] sm:$0xf]
    %v238 = vld [vmem:[#allocation7 + $0x8] sm:$0xf]
    %v239 = vld [vmem:[#allocation7 + $0xc] sm:$0xf]
    %v240 = vld [vmem:[#allocation7 + $0x10] sm:$0xf]
    %v241 = vld [vmem:[#allocation7 + $0x14] sm:$0xf]
    %v242 = vld [vmem:[#allocation7 + $0x18] sm:$0xf]
    %v243 = vld [vmem:[#allocation7 + $0x1c] sm:$0xf]
    %v244 = vld [vmem:[#allocation7 + $0x20] sm:$0xf]
    %v245 = vld [vmem:[#allocation7 + $0x24] sm:$0xf]
    %v246 = vld [vmem:[#allocation7 + $0x28] sm:$0xf]
    %v247 = vld [vmem:[#allocation7 + $0x2c] sm:$0xf]
    %v248 = vld [vmem:[#allocation7 + $0x30] sm:$0xf]
    %v249 = vld [vmem:[#allocation7 + $0x34] sm:$0xf]
    %v250 = vld [vmem:[#allocation7 + $0x38] sm:$0xf]
    %v251 = vld [vmem:[#allocation7 + $0x3c] sm:$0xf]
    %v252 = vld [vmem:[%s4 + $0x2] sm:$0x1]
    %v253 = vpack.c.bf16 %v235, %v235
    %v254 = vlaneseq
    %v255 = vshrl.u32 %v254, 7
    %v256 = vsub.s32 0, %v255
    %v257 = vrot.slane %v252, %v256
    %v274 = vunpack.c.l.b16 %v236
    %v275 = vunpack.c.l.b16 %v237
    %v276 = vunpack.c.l.b16 %v238
    %v277 = vunpack.c.l.b16 %v239
    %v278 = vunpack.c.l.b16 %v240
    %v279 = vunpack.c.l.b16 %v241
    %v280 = vunpack.c.l.b16 %v242
    %v281 = vunpack.c.l.b16 %v243
    %v282 = vunpack.c.l.b16 %v244
    %v283 = vunpack.c.l.b16 %v245
    %v284 = vunpack.c.l.b16 %v246
    %v285 = vunpack.c.l.b16 %v247
    %v286 = vunpack.c.l.b16 %v248
    %v287 = vunpack.c.l.b16 %v249
    %v288 = vunpack.c.l.b16 %v250
    %v289 = vunpack.c.l.b16 %v251
    %v290 = vpack.c.b16 %v275, %v274
    %v291 = vpack.c.b16 %v277, %v276
    %v292 = vpack.c.b16 %v279, %v278
    %v293 = vpack.c.b16 %v281, %v280
    %v294 = vpack.c.b16 %v283, %v282
    %v295 = vpack.c.b16 %v285, %v284
    %v296 = vpack.c.b16 %v287, %v286
    %v297 = vpack.c.b16 %v289, %v288
    %306 = vmatprep.subr.bf16.mxu0 0
    %307 = vmatpush1.bf16.msra.mxu0 %v290
    %308 = vmatprep.subr.bf16.mxu0 0
    %309 = vmatpush1.bf16.msra.mxu0 %v291
    %310 = vmatprep.subr.bf16.mxu0 0
    %311 = vmatpush1.bf16.msra.mxu0 %v292
    %312 = vmatprep.subr.bf16.mxu0 0
    %313 = vmatpush1.bf16.msra.mxu0 %v293
    %314 = vmatprep.subr.bf16.mxu0 0
    %315 = vmatpush1.bf16.msra.mxu0 %v294
    %316 = vmatprep.subr.bf16.mxu0 0
    %317 = vmatpush1.bf16.msra.mxu0 %v295
    %318 = vmatprep.subr.bf16.mxu0 0
    %319 = vmatpush1.bf16.msra.mxu0 %v296
    %320 = vmatprep.subr.bf16.mxu0 0
    %321 = vmatpush1.bf16.msra.mxu0 %v297
    %322 = vmatprep.subr.bf16.mxu0 0
    %323 = vmatpush1.bf16.msra.mxu0 0
    %324 = vmatprep.subr.bf16.mxu0 0
    %325 = vmatpush1.bf16.msra.mxu0 0
    %326 = vmatprep.subr.bf16.mxu0 0
    %327 = vmatpush1.bf16.msra.mxu0 0
    %328 = vmatprep.subr.bf16.mxu0 0
    %329 = vmatpush1.bf16.msra.mxu0 0
    %330 = vmatprep.subr.bf16.mxu0 0
    %331 = vmatpush1.bf16.msra.mxu0 0
    %332 = vmatprep.subr.bf16.mxu0 0
    %333 = vmatpush1.bf16.msra.mxu0 0
    %334 = vmatprep.subr.bf16.mxu0 0
    %335 = vmatpush1.bf16.msra.mxu0 0
    %336 = vmatprep.subr.bf16.mxu0 0
    %337 = vmatpush1.bf16.msra.mxu0 0
    %338 = vmatprep.mubr.bf16.mxu0 0
    %339 = vmatmul.mubr.bf16.gmra.mrb[0].mxu0 %v253
    %v340 = vpop.f32.mrb[0].mxu0
    %v341 = vadd.f32 %v257, %v340
    %v342 = vpop.f32.mrb[0].mxu0
    %v343 = vpop.f32.mrb[0].mxu0
    %v344 = vpop.f32.mrb[0].mxu0
    %345 = vdwg.mxu0
    %346 = vst [vmem:[#allocation8] sm:$0xff] %v341
    // Predicated region
    $region34: #{_mlp_forward_impl.1} parent=1 // pred_check
      _
    $region35: #{_mlp_forward_impl.1} parent=1 // pred_check_branch
      %348 = sbr.rel (0) target = $region37
    $region36: #{_mlp_forward_impl.1} parent=1 // pred_region
      %s350 = ssub.s32 128, 128
      %351 = vsyncadd [#allocation4], %s350
      %s353 = sshll.u32 [#allocation8], 4
      %s354 = int_to_ptr.vmem [resolvable:$true] %s353
      %356 = dma.vmem_to_hbm [thread:$0]  %s354, 128, %s5, [#allocation4]
    $region37: #{_mlp_forward_impl.1} parent=1 // pred_fallthru
      _
    // Predicated region
    $region38: #{_mlp_forward_impl.1} parent=1 // pred_check
      _
    $region39: #{_mlp_forward_impl.1} parent=1 // pred_check_branch
      %358 = sbr.rel (0) target = $region41
    $region40: #{_mlp_forward_impl.1} parent=1 // pred_region
      %359 = dma.done [#allocation4], 128
    $region41: #{_mlp_forward_impl.1} parent=1 // pred_fallthru
      _
    %360 = vsyncpa [#allocation3], 1
    %361 = vsyncpa [#allocation6], 1
    %362 = vsyncpa [#allocation4], 1

</llo_original>
